<compile_context>
chip_gen: v6e
topology: v6e:2x2x1
jax: 0.10.0
libtpu: 0.0.40
codegen_flags: <defaults>
</compile_context>

<pallas_src>
import functools

import jax
import jax.numpy as jnp
from jax import lax
from jax.experimental import pallas as pl
from jax.experimental.pallas import tpu as pltpu


def _round_up(x, m):
    return (x + m - 1) // m * m


def _choose_tm(M, cap=512):
    """Largest multiple-of-8 tile <= cap that divides M exactly (prefer an even tile
    count for v7x megacore balance).  Falls back to minimal 8-granular padding."""
    start = min(cap, M)
    start -= start % 8
    best = None
    for tm in range(start, 7, -8):
        if M % tm == 0:
            if best is None:
                best = tm
            if (M // tm) % 2 == 0:
                return tm, M
    if best is not None:
        return best, M
    tm = min(cap, _round_up(M, 8))
    return tm, _round_up(M, tm)


def _patch_embed_kernel(x_ref, w_ref, b_ref, o_ref):
    # x_ref: (TM, Kp) flattened-patch tile
    # w_ref: (TE, Kp) conv weight tile, PyTorch (E, K) layout (contract on last dim)
    # b_ref: (1,  TE) bias tile (f32)
    # o_ref: (TM, TE) output tile
    acc = lax.dot_general(
        x_ref[...],
        w_ref[...],
        dimension_numbers=(((1,), (1,)), ((), ())),   # NT matmul on the MXU
        preferred_element_type=jnp.float32,
    )
    o_ref[...] = (acc + b_ref[...]).astype(o_ref.dtype)


@functools.partial(jax.jit, static_argnames=("patch_size", "compute_dtype", "out_dtype"))
def conv_embedding_forward(x, weight, bias, patch_size, compute_dtype=None, out_dtype=None):
    """x: (B, C, H, W) NCHW. weight: (E, C, P, P). bias: (E,). Returns (B, N, E).

    Matches PyTorch: conv2d(stride=kernel=P) -> view(B, E, -1) -> transpose(1, 2).
    """
    B, C, H, W = x.shape
    E = weight.shape[0]
    P = patch_size
    assert H % P == 0 and W % P == 0
    nh, nw = H // P, W // P
    N = nh * nw
    M, K = B * N, C * P * P

    if compute_dtype is None:
        compute_dtype = x.dtype   # pass jnp.bfloat16 on v6e/v7x (kernel is HBM-bound there)
    if out_dtype is None:
        out_dtype = x.dtype

    # --- lane-dense padding of the contraction and embedding dims ---
    Kp = _round_up(K, 128)
    Ep = _round_up(E, 128)
    TM, Mp = _choose_tm(M)

    cb = jnp.dtype(compute_dtype).itemsize
    ob = jnp.dtype(out_dtype).itemsize

    def footprint(te):
        # conservative (everything double-buffered) per-step VMEM working set
        return 2 * TM * Kp * cb + 2 * te * Kp * cb + 2 * te * 4 + 2 * TM * te * ob

    VMEM_BUDGET = 44 * 1024 * 1024   # headroom vs v7x's 64 MiB per TensorCore

    TE = Ep
    if footprint(Ep) > VMEM_BUDGET:
        for cand in (512, 256, 128):
            if Ep % cand == 0:
                TE = cand
                if footprint(cand) <= VMEM_BUDGET:
                    break
    resident = TE == Ep

    vmem_limit = int(
        min(max(footprint(TE) + 8 * 1024 * 1024, 16 * 1024 * 1024), 64 * 1024 * 1024)
    )

    # --- glue: patchify (non-overlapping PxP patches, flattened (c, ky, kx)-major) ---
    patches = x.reshape(B, C, nh, P, nw, P)
    patches = jnp.transpose(patches, (0, 2, 4, 1, 3, 5)).reshape(M, K)
    patches = jnp.pad(patches, ((0, Mp - M), (0, Kp - K))).astype(compute_dtype)

    # conv weight kept in PyTorch (E, K) layout; zero padding contributes nothing.
    w_mat = jnp.pad(weight.reshape(E, K), ((0, Ep - E), (0, Kp - K))).astype(compute_dtype)
    b_mat = jnp.pad(bias.astype(jnp.float32), ((0, Ep - E),)).reshape(1, Ep)

    n_m = Mp // TM

    if resident:
        grid = (n_m,)
        in_specs = [
            pl.BlockSpec((TM, Kp), lambda i: (i, 0)),    # patches: streamed over M
            pl.BlockSpec((Ep, Kp), lambda i: (0, 0)),    # weight: resident, fetched once
            pl.BlockSpec((1, Ep), lambda i: (0, 0)),     # bias: resident
        ]
        out_specs = pl.BlockSpec((TM, Ep), lambda i: (i, 0))
        dim_sem = ("parallel",)
        patches_passes = 1
    else:
        # E outer / M inner: weight block index only changes with the outer axis,
        # so each weight tile is DMA'd exactly once.
        grid = (Ep // TE, n_m)
        in_specs = [
            pl.BlockSpec((TM, Kp), lambda e, m: (m, 0)),
            pl.BlockSpec((TE, Kp), lambda e, m: (e, 0)),
            pl.BlockSpec((1, TE), lambda e, m: (0, e)),
        ]
        out_specs = pl.BlockSpec((TM, TE), lambda e, m: (m, e))
        dim_sem = ("parallel", "parallel")
        patches_passes = Ep // TE

    cost = pl.CostEstimate(
        flops=2 * Mp * Kp * Ep,
        transcendentals=0,
        bytes_accessed=(
            patches_passes * Mp * Kp * cb + Ep * Kp * cb + Ep * 4 + Mp * Ep * ob
        ),
    )

    out = pl.pallas_call(
        _patch_embed_kernel,
        out_shape=jax.ShapeDtypeStruct((Mp, Ep), out_dtype),
        grid_spec=pltpu.PrefetchScalarGridSpec(
            num_scalar_prefetch=0,
            grid=grid,
            in_specs=in_specs,
            out_specs=out_specs,
        ),
        compiler_params=pltpu.CompilerParams(
            dimension_semantics=dim_sem,
            vmem_limit_bytes=vmem_limit,
            allow_input_fusion=[True, False, False],
        ),
        cost_estimate=cost,
    )(patches, w_mat, b_mat)

    if Mp != M or Ep != E:
        out = out[:M, :E]
    # (M, E) -> (B, N, E)  == PyTorch's view(B, E, -1).transpose(1, 2)
    return out.reshape(B, N, E)


if __name__ == "__main__":
    # Small shapes: B=2, C=4, H=W=16, patch=4, embedding=32
    B, C, H, W = 2, 4, 16, 16
    P = 4
    E = 32

    key = jax.random.PRNGKey(0)
    kx, kw, kb = jax.random.split(key, 3)

    x = jax.random.normal(kx, (B, C, H, W), dtype=jnp.float32)
    # Deterministic synthetic parameters with Conv2d shapes: weight (E, C, P, P), bias (E,)
    weight = jax.random.normal(kw, (E, C, P, P), dtype=jnp.float32) * 0.05
    bias = jax.random.normal(kb, (E,), dtype=jnp.float32) * 0.01

    out = jax.block_until_ready(conv_embedding_forward(x, weight, bias, patch_size=P))

    # Reference (pure JAX conv) to validate semantics.
    ref = lax.conv_general_dilated(
        x, weight, window_strides=(P, P), padding="VALID",
        dimension_numbers=("NCHW", "OIHW", "NCHW"),
    ) + bias.reshape(1, E, 1, 1)
    ref = ref.reshape(B, E, -1).transpose(0, 2, 1)

    assert out.shape == (B, (H // P) * (W // P), E)
    assert jnp.allclose(out, ref, atol=1e-4, rtol=1e-4)

    # bf16-input / f32-accumulate fast path (full MXU rate + halved HBM traffic on v6e/v7x).
    out_bf16 = jax.block_until_ready(
        conv_embedding_forward(x, weight, bias, patch_size=P, compute_dtype=jnp.bfloat16)
    )
    assert out_bf16.shape == ref.shape
    assert jnp.allclose(out_bf16, ref, atol=1e-1, rtol=1e-1)

    print("KERNEL_OK")
</pallas_src>

<mosaic_0001>
module attributes {stable_mosaic.version = 11 : i64} {
  func.func @_patch_embed_kernel(%arg0: i32, %arg1: memref<16x128xf32, #tpu.memory_space<vmem>>, %arg2: memref<128x128xf32, #tpu.memory_space<vmem>>, %arg3: memref<1x128xf32, #tpu.memory_space<vmem>>, %arg4: memref<16x128xf32, #tpu.memory_space<vmem>>) attributes {dimension_semantics = [#tpu.dimension_semantics<parallel>], iteration_bounds = array<i64: 2>, scalar_prefetch = 0 : i64, scratch_operands = 0 : i64, tpu.core_type = #tpu.core_type<tc>, window_params = [{transform_indices = @transform_0, window_bounds = array<i64: 16, 128>}, {pipeline_mode = #tpu.pipeline_mode<synchronous>, transform_indices = @transform_1, window_bounds = array<i64: 128, 128>}, {pipeline_mode = #tpu.pipeline_mode<synchronous>, transform_indices = @transform_2, window_bounds = array<i64: 1, 128>}, {transform_indices = @transform_3, window_bounds = array<i64: 16, 128>}]} {
    %c0 = arith.constant 0 : index
    %c0_0 = arith.constant 0 : index
    %0 = vector.load %arg1[%c0, %c0_0] : memref<16x128xf32, #tpu.memory_space<vmem>>, vector<16x128xf32>
    %c0_1 = arith.constant 0 : index
    %c0_2 = arith.constant 0 : index
    %1 = vector.load %arg2[%c0_1, %c0_2] : memref<128x128xf32, #tpu.memory_space<vmem>>, vector<128x128xf32>
    %cst = arith.constant dense<0.000000e+00> : vector<16x128xf32>
    %2 = tpu.matmul %0, %1, %cst {dimension_numbers = #tpu.dot_dimension_numbers<[1], [1], [0], [0], [0, 0, 1, 0], [], []>} : vector<16x128xf32>, vector<128x128xf32>, vector<16x128xf32> -> vector<16x128xf32>
    %c0_3 = arith.constant 0 : index
    %c0_4 = arith.constant 0 : index
    %3 = vector.load %arg3[%c0_3, %c0_4] : memref<1x128xf32, #tpu.memory_space<vmem>>, vector<1x128xf32>
    %4 = vector.broadcast %3 : vector<1x128xf32> to vector<16x128xf32>
    %5 = arith.addf %2, %4 : vector<16x128xf32>
    %c0_5 = arith.constant 0 : index
    %c0_6 = arith.constant 0 : index
    %6 = vector.load %arg4[%c0_5, %c0_6] : memref<16x128xf32, #tpu.memory_space<vmem>>, vector<16x128xf32>
    tpu.vector_store %arg4[%c0_5, %c0_6], %5 {strides = array<i32>} : memref<16x128xf32, #tpu.memory_space<vmem>>, vector<16x128xf32>,
    return
  }
  func.func @transform_0(%arg0: i32) -> (i32, i32) {
    %c0_i32 = arith.constant 0 : i32
    %c0_i32_0 = arith.constant 0 : i32
    return %arg0, %c0_i32 : i32, i32
  }
  func.func @transform_1(%arg0: i32) -> (i32, i32) {
    %c0_i32 = arith.constant 0 : i32
    %c0_i32_0 = arith.constant 0 : i32
    %c0_i32_1 = arith.constant 0 : i32
    return %c0_i32, %c0_i32_0 : i32, i32
  }
  func.func @transform_2(%arg0: i32) -> (i32, i32) {
    %c0_i32 = arith.constant 0 : i32
    %c0_i32_0 = arith.constant 0 : i32
    %c0_i32_1 = arith.constant 0 : i32
    return %c0_i32, %c0_i32_0 : i32, i32
  }
  func.func @transform_3(%arg0: i32) -> (i32, i32) {
    %c0_i32 = arith.constant 0 : i32
    %c0_i32_0 = arith.constant 0 : i32
    return %arg0, %c0_i32 : i32, i32
  }
}

</mosaic_0001>

<llo_original>
// kernel: conv_embedding_forward.2
$region0: #{conv_embedding_forward.2}
  #allocation0 [shape = 'u32[]', space=smem, size = 0x4, offset = 0x4, fixed_abs, tag = 'smem constant byte address 0x4 - core index']
  #allocation1 [shape = 'u32[144,128]{1,0:T(1,128)}', space=vmem, size = 0x12000, scoped, tag = 'internal scratch']
  #allocation2 [shape = 'u32[2048]{0}', space=vmem, size = 0x2000, scoped, tag = 'scoped memory for conv_embedding_forward.2']
  #allocation3 [shape = 'u32[2048]{0}', space=vmem, size = 0x2000, scoped, tag = 'scoped memory for conv_embedding_forward.2']
  #allocation4 [shape = 'u32[2048]{0}', space=vmem, size = 0x2000, scoped, tag = 'scoped memory for conv_embedding_forward.2']
  #allocation5 [shape = 'u32[2048]{0}', space=vmem, size = 0x2000, scoped, tag = 'scoped memory for conv_embedding_forward.2']
  #allocation6 [shape = 'u32[2048]{0}', space=vmem, size = 0x2000, scoped, tag = 'scoped memory for conv_embedding_forward.2']
  %s0 = inlined_call_operand.vmem [shape: f32[128,128], index: 0, kind: input, shape index: {}]
  %s1 = inlined_call_operand.vmem [shape: f32[1,128], index: 1, kind: input, shape index: {}]
  %s2 = inlined_call_operand.vmem [shape: f32[32,64], index: 2, kind: input, shape index: {}]
  %s3 = inlined_call_operand.<no memory space> [shape: f32[], index: 3, kind: input, shape index: {}]
  %s4 = inlined_call_operand.hbm [shape: f32[32,128], index: 4, kind: output, shape index: {}]
  %s5 = sld [smem:[#allocation0]]
  $region45: #{conv_embedding_forward.2} parent=0
    _
  %s7 = ssub.s32 1, %s5
  %s8 = scalar_select 0, %s7, %s5
  %v9 = vstv %s3
  $region1: #{conv_embedding_forward.2} parent=0
    #allocation7 [shape = 'u8[16384]{0}', space=vmem, size = 0x4000, scoped, tag = 'output window, operand 0']
    #allocation8 [shape = 's32[2]{0}', space=sflag, size = 0x8, scoped, tag = 'scoped memory for conv_embedding_forward.2']
    %10 = vsyncpa [#allocation8], 0
    %s11 = scalar_lea.sflag [#allocation8], 1
    %12 = vsyncpa %s11, 0
    loop: start=0, step=1, limit=4
    $region2: #{conv_embedding_forward.2} parent=1 // loop_pre_header
      _
    $region3: #{conv_embedding_forward.2} parent=1 // loop_header
      %s14 = sphi 0, %s18
      %p15 = scmp.ge.s32.totalorder %s14, 4
      %s24 = sphi 0, %s26
      %s27 = sphi 0, %s24
      %s28 = sphi 0, %s27
      %s44 = sphi 0, %s28
      %s48 = sphi 0, %s48
      %s50 = sphi 0, %s48
      %s51 = sphi 0, %s50
      %s65 = sphi 0, %s51
      %s69 = sphi 0, %s69
      %s71 = sphi 0, %s69
      %s72 = sphi 0, %s71
      %s86 = sphi 0, %s72
      %s92 = sphi 0, %s94
      %s95 = sphi 0, %s92
      %s96 = sphi 0, %s95
      %s112 = sphi 0, %s96
    $region4: #{conv_embedding_forward.2} parent=1 // loop_header_branch
      %17 = sbr.rel (%p15) target = $region8
    $region5: #{conv_embedding_forward.2} parent=1 // loop_body
      %s19 = ssub.s32 %s14, 1
      %s20 = ssub.s32 %s14, 2
      %s21 = sadd.s32 %s14, 1
      %s22 = ssub.s32 %s14, %s21
      %p23 = scmp.eq.s32.totalorder %s22, 0
      %s25 = sadd.s32 %s24, 1
      %s26 = scalar_select %p23, %s24, %s25
      %p29 = pneg %p23
      %p30 = scmp.eq.s32.totalorder %s14, 1
      %p31 = por %p29, %p30
      %p32 = scmp.ne.s32.totalorder %s24, %s27
      %p33 = scmp.eq.s32.totalorder %s14, 0
      %p34 = por %p32, %p33
      %p35 = scmp.ne.s32.totalorder %s24, %s27
      %p36 = scmp.eq.s32.totalorder %s19, 1
      %p37 = por %p35, %p36
      %p38 = scmp.ne.s32.totalorder %s27, %s28
      %p39 = scmp.eq.s32.totalorder %s19, 0
      %p40 = por %p38, %p39
      %p41 = scmp.ne.s32.totalorder %s27, %s28
      %p42 = scmp.eq.s32.totalorder %s20, 1
      %p43 = por %p41, %p42
      %p45 = scmp.ne.s32.totalorder %s28, %s44
      %p46 = scmp.eq.s32.totalorder %s20, 0
      %p47 = por %p45, %p46
      %s49 = sadd.s32 %s48, 1
      %p52 = scmp.eq.s32.totalorder %s14, 1
      %p53 = scmp.ne.s32.totalorder %s48, %s50
      %p54 = scmp.eq.s32.totalorder %s14, 0
      %p55 = por %p53, %p54
      %p56 = scmp.ne.s32.totalorder %s48, %s50
      %p57 = scmp.eq.s32.totalorder %s19, 1
      %p58 = por %p56, %p57
      %p59 = scmp.ne.s32.totalorder %s50, %s51
      %p60 = scmp.eq.s32.totalorder %s19, 0
      %p61 = por %p59, %p60
      %p62 = scmp.ne.s32.totalorder %s50, %s51
      %p63 = scmp.eq.s32.totalorder %s20, 1
      %p64 = por %p62, %p63
      %p66 = scmp.ne.s32.totalorder %s51, %s65
      %p67 = scmp.eq.s32.totalorder %s20, 0
      %p68 = por %p66, %p67
      %s70 = sadd.s32 %s69, 1
      %p73 = scmp.eq.s32.totalorder %s14, 1
      %p74 = scmp.ne.s32.totalorder %s69, %s71
      %p75 = scmp.eq.s32.totalorder %s14, 0
      %p76 = por %p74, %p75
      %p77 = scmp.ne.s32.totalorder %s69, %s71
      %p78 = scmp.eq.s32.totalorder %s19, 1
      %p79 = por %p77, %p78
      %p80 = scmp.ne.s32.totalorder %s71, %s72
      %p81 = scmp.eq.s32.totalorder %s19, 0
      %p82 = por %p80, %p81
      %p83 = scmp.ne.s32.totalorder %s71, %s72
      %p84 = scmp.eq.s32.totalorder %s20, 1
      %p85 = por %p83, %p84
      %p87 = scmp.ne.s32.totalorder %s72, %s86
      %p88 = scmp.eq.s32.totalorder %s20, 0
      %p89 = por %p87, %p88
      %s90 = ssub.s32 %s14, %s21
      %p91 = scmp.eq.s32.totalorder %s90, 0
      %s93 = sadd.s32 %s92, 1
      %s94 = scalar_select %p91, %s92, %s93
      %p97 = pneg %p91
      %p98 = scmp.eq.s32.totalorder %s14, 1
      %p99 = por %p97, %p98
      %p100 = scmp.ne.s32.totalorder %s92, %s95
      %p101 = scmp.eq.s32.totalorder %s14, 0
      %p102 = por %p100, %p101
      %p103 = scmp.ne.s32.totalorder %s92, %s95
      %p104 = scmp.eq.s32.totalorder %s19, 1
      %p105 = por %p103, %p104
      %p106 = scmp.ne.s32.totalorder %s95, %s96
      %p107 = scmp.eq.s32.totalorder %s19, 0
      %p108 = por %p106, %p107
      %p109 = scmp.ne.s32.totalorder %s95, %s96
      %p110 = scmp.eq.s32.totalorder %s20, 1
      %p111 = por %p109, %p110
      %p113 = scmp.ne.s32.totalorder %s96, %s112
      %p114 = scmp.eq.s32.totalorder %s20, 0
      %p115 = por %p113, %p114
      %p116 = scmp.le.s32.totalorder 1, %s14
      %p117 = scmp.lt.s32.totalorder %s14, 3
      %p118 = pnand %p116, %p117
      %p119 = pneg %p118
      // Predicated region
      $region9: #{conv_embedding_forward.2} parent=5 // pred_check
        _
      $region10: #{conv_embedding_forward.2} parent=5 // pred_check_branch
        %121 = sbr.rel (%p118) target = $region12
      $region11: #{conv_embedding_forward.2} parent=5 // pred_region
        %s122 = ssub.s32 %s14, 1
        // Predicated region
        $region13: #{conv_embedding_forward.2} parent=11 // pred_check
          %p123 = pneg %p61
        $region14: #{conv_embedding_forward.2} parent=11 // pred_check_branch
          %125 = sbr.rel (%p123) target = $region16
        $region15: #{conv_embedding_forward.2} parent=11 // pred_region
          _
        $region16: #{conv_embedding_forward.2} parent=11 // pred_fallthru
          _
        // Predicated region
        $region17: #{conv_embedding_forward.2} parent=11 // pred_check
          %p126 = pneg %p82
        $region18: #{conv_embedding_forward.2} parent=11 // pred_check_branch
          %128 = sbr.rel (%p126) target = $region20
        $region19: #{conv_embedding_forward.2} parent=11 // pred_region
          _
        $region20: #{conv_embedding_forward.2} parent=11 // pred_fallthru
          _
      $region12: #{conv_embedding_forward.2} parent=5 // pred_fallthru
        _
      %p129 = scmp.lt.s32.totalorder %s14, 2
      // Predicated region
      $region21: #{conv_embedding_forward.2} parent=5 // pred_check
        %p130 = pneg %p129
      $region22: #{conv_embedding_forward.2} parent=5 // pred_check_branch
        %132 = sbr.rel (%p130) target = $region24
      $region23: #{conv_embedding_forward.2} parent=5 // pred_region
        // Predicated region
        $region25: #{conv_embedding_forward.2} parent=23 // pred_check
          %p133 = pneg %p34
        $region26: #{conv_embedding_forward.2} parent=23 // pred_check_branch
          %135 = sbr.rel (%p133) target = $region28
        $region27: #{conv_embedding_forward.2} parent=23 // pred_region
          %s136 = smul.u32 2, %s14
          %p137 = scmp.lt.s32.totalorder %s136, 3
          %s138 = scalar_select %p137, %s136, 3
          %s139 = smul.addr %s138, 8
          %s140 = scalar_lea.vmem %s2, %s139
          %s141 = smul.u32 2, %s14
        $region28: #{conv_embedding_forward.2} parent=23 // pred_fallthru
          _
      $region24: #{conv_embedding_forward.2} parent=5 // pred_fallthru
        _
      %p142 = scmp.le.s32.totalorder 1, %s14
      %p143 = scmp.lt.s32.totalorder %s14, 3
      %p144 = pnand %p142, %p143
      %p145 = pneg %p144
      // Predicated region
      $region29: #{conv_embedding_forward.2} parent=5 // pred_check
        _
      $region30: #{conv_embedding_forward.2} parent=5 // pred_check_branch
        %147 = sbr.rel (%p144) target = $region32
      $region31: #{conv_embedding_forward.2} parent=5 // pred_region
        #allocation9 [shape = 'u8[8192]{0}', space=vmem, size = 0x2000, dematerialized = true, scoped, tag = 'FusionAdapter Buffer %fusion.1 = f32[32,128]{1,0:T(8,128)} fusion(%param_2.1, %param_3), kind=kLoop, calls=%fused_computation.2.clone, metadata={op_name="jit(conv_embedding_forward)/jit(_pad)/pad" stack_frame_id=9}']
        %s148 = ssub.s32 %s14, 1
        %s149 = smul.u32 2, %s19
        %p150 = scmp.lt.s32.totalorder %s149, 3
        %s151 = scalar_select %p150, %s149, 3
        %s152 = smul.addr %s151, 8
        %s153 = scalar_lea.vmem %s2, %s152
        %p154 = pneg %p40
        %p155 = pneg %p37
        %p156 = pneg %p61
        %p157 = pneg %p58
        %p158 = pneg %p82
        %p159 = pneg %p79
        %p160 = pneg %p108
        %p161 = pneg %p105
        %s162 = sand.u32 %s95, 1
        %s163 = scalar_lea.sflag [#allocation8], %s162
        %s164 = sand.u32 %s95, 1
        %s165 = smul.addr %s164, 16
        %s166 = scalar_lea.vmem [#allocation7], %s165
        %s167 = smul.u32 2, %s19
        %p168 = scmp.lt.s32.totalorder %s167, 3
        %s169 = scalar_select %p168, %s167, 3
        %s170 = smul.addr %s169, 8
        %s171 = scalar_lea.vmem %s2, %s170
        %s172 = smul.u32 2, %s19
        %s173 = smul.u32 2, %s19
        %v174 = vld [vmem:[%s171] sm:$0xff]
        %v175 = vlaneseq
        %v176 = vand.u32 %v175, 127
        %vm178 = vcmp.lt.s32.totalorder %v176, 64
        %v179 = vsel %vm178, %v174, %v9
        %s181 = ssub.s32 256, 1
        %182 = vst [vmem:[#allocation9] sm:%s181] %v179
        %s183 = scalar_lea.vmem %s171, 8
        %v184 = vld [vmem:[%s183] sm:$0xff]
        %v185 = vlaneseq
        %v186 = vand.u32 %v185, 127
        %vm188 = vcmp.lt.s32.totalorder %v186, 64
        %v189 = vsel %vm188, %v184, %v9
        %s190 = scalar_lea.vmem [#allocation9], 8
        %s192 = ssub.s32 256, 1
        %193 = vst [vmem:[%s190] sm:%s192] %v189
        %v194 = vld [vmem:[#allocation9] sm:$0xff]
        %v195 = vld [vmem:[#allocation9 + $0x8] sm:$0xff]
        %v196 = vld [vmem:[%s0] sm:$0xff]
        %v197 = vld [vmem:[%s0 + $0x8] sm:$0xff]
        %v198 = vld [vmem:[%s0 + $0x10] sm:$0xff]
        %v199 = vld [vmem:[%s0 + $0x18] sm:$0xff]
        %v200 = vld [vmem:[%s0 + $0x20] sm:$0xff]
        %v201 = vld [vmem:[%s0 + $0x28] sm:$0xff]
        %v202 = vld [vmem:[%s0 + $0x30] sm:$0xff]
        %v203 = vld [vmem:[%s0 + $0x38] sm:$0xff]
        %v204 = vld [vmem:[%s0 + $0x40] sm:$0xff]
        %v205 = vld [vmem:[%s0 + $0x48] sm:$0xff]
        %v206 = vld [vmem:[%s0 + $0x50] sm:$0xff]
        %v207 = vld [vmem:[%s0 + $0x58] sm:$0xff]
        %v208 = vld [vmem:[%s0 + $0x60] sm:$0xff]
        %v209 = vld [vmem:[%s0 + $0x68] sm:$0xff]
        %v210 = vld [vmem:[%s0 + $0x70] sm:$0xff]
        %v211 = vld [vmem:[%s0 + $0x78] sm:$0xff]
        %v212 = vld [vmem:[%s1] sm:$0x1]
        %v214 = vlaneseq
        %v215 = vshrl.u32 %v214, 7
        %v216 = vsub.s32 0, %v215
        %v217 = vrot.slane %v212, %v216
        %219 = vmatprep.subr.mxu0 0.0
        %220 = vmatpush1.xpose.msra.mxu0 %v211
        %221 = vmatprep.subr.mxu0 0.0
        %222 = vmatpush1.xpose.msra.mxu0 %v210
        %223 = vmatprep.subr.mxu0 0.0
        %224 = vmatpush1.xpose.msra.mxu0 %v209
        %225 = vmatprep.subr.mxu0 0.0
        %226 = vmatpush1.xpose.msra.mxu0 %v208
        %227 = vmatprep.subr.mxu0 0.0
        %228 = vmatpush1.xpose.msra.mxu0 %v207
        %229 = vmatprep.subr.mxu0 0.0
        %230 = vmatpush1.xpose.msra.mxu0 %v206
        %231 = vmatprep.subr.mxu0 0.0
        %232 = vmatpush1.xpose.msra.mxu0 %v205
        %233 = vmatprep.subr.mxu0 0.0
        %234 = vmatpush1.xpose.msra.mxu0 %v204
        %235 = vmatprep.subr.mxu0 0.0
        %236 = vmatpush1.xpose.msra.mxu0 %v203
        %237 = vmatprep.subr.mxu0 0.0
        %238 = vmatpush1.xpose.msra.mxu0 %v202
        %239 = vmatprep.subr.mxu0 0.0
        %240 = vmatpush1.xpose.msra.mxu0 %v201
        %241 = vmatprep.subr.mxu0 0.0
        %242 = vmatpush1.xpose.msra.mxu0 %v200
        %243 = vmatprep.subr.mxu0 0.0
        %244 = vmatpush1.xpose.msra.mxu0 %v199
        %245 = vmatprep.subr.mxu0 0.0
        %246 = vmatpush1.xpose.msra.mxu0 %v198
        %247 = vmatprep.subr.mxu0 0.0
        %248 = vmatpush1.xpose.msra.mxu0 %v197
        %249 = vmatprep.subr.mxu0 0.0
        %250 = vmatpush1.xpose.msra.mxu0 %v196
        %251 = vmatprep.subr.mxu0 0.0
        %252 = vmatpush2.xpose.msra.mxu0 0.0
        %253 = vmatprep.subr.mxu0 0.0
        %254 = vmatpush2.xpose.msra.mxu0 0.0
        %255 = vmatprep.subr.mxu0 0.0
        %256 = vmatpush2.xpose.msra.mxu0 0.0
        %257 = vmatprep.subr.mxu0 0.0
        %258 = vmatpush2.xpose.msra.mxu0 0.0
        %259 = vmatprep.subr.mxu0 0.0
        %260 = vmatpush2.xpose.msra.mxu0 0.0
        %261 = vmatprep.subr.mxu0 0.0
        %262 = vmatpush2.xpose.msra.mxu0 0.0
        %263 = vmatprep.subr.mxu0 0.0
        %264 = vmatpush2.xpose.msra.mxu0 0.0
        %265 = vmatprep.subr.mxu0 0.0
        %266 = vmatpush2.xpose.msra.mxu0 0.0
        %267 = vmatprep.subr.mxu0 0.0
        %268 = vmatpush2.xpose.msra.mxu0 0.0
        %269 = vmatprep.subr.mxu0 0.0
        %270 = vmatpush2.xpose.msra.mxu0 0.0
        %271 = vmatprep.subr.mxu0 0.0
        %272 = vmatpush2.xpose.msra.mxu0 0.0
        %273 = vmatprep.subr.mxu0 0.0
        %274 = vmatpush2.xpose.msra.mxu0 0.0
        %275 = vmatprep.subr.mxu0 0.0
        %276 = vmatpush2.xpose.msra.mxu0 0.0
        %277 = vmatprep.subr.mxu0 0.0
        %278 = vmatpush2.xpose.msra.mxu0 0.0
        %279 = vmatprep.subr.mxu0 0.0
        %280 = vmatpush2.xpose.msra.mxu0 0.0
        %281 = vmatprep.subr.mxu0 0.0
        %282 = vmatpush2.xpose.msra.mxu0 0.0
        %283 = vmatprep.mubr.f32.mxu0 0.0
        %284 = vmatmul.mubr.f32.gmra.mxu0 %v194
        %v285 = vpop.f32.mrf.mxu0
        %v286 = vadd.f32 %v217, %v285
        %v287 = vpop.f32.mrf.mxu0
        %288 = vmatprep.mubr.f32.mxu0 0.0
        %289 = vmatmul.mubr.f32.gmra.mxu0 %v195
        %v290 = vpop.f32.mrf.mxu0
        %v291 = vadd.f32 %v217, %v290
        %v292 = vpop.f32.mrf.mxu0
        %293 = vdwg.mxu0
        %294 = vst [vmem:[%s166] sm:$0xff] %v286
        %295 = vst [vmem:[%s166 + $0x8] sm:$0xff] %v291
        %s296 = sand.u32 %s95, 1
        %s297 = scalar_lea.sflag [#allocation8], %s296
        %s298 = sand.u32 %s95, 1
        %s299 = smul.addr %s298, 16
        %s300 = scalar_lea.vmem [#allocation7], %s299
        // Predicated region
        $region33: #{conv_embedding_forward.2} parent=31 // pred_check
          %p301 = pneg %p105
        $region34: #{conv_embedding_forward.2} parent=31 // pred_check_branch
          %303 = sbr.rel (%p301) target = $region36
        $region35: #{conv_embedding_forward.2} parent=31 // pred_region
          %s304 = smul.u32 2, %s19
          %s306 = ssub.s32 256, 256
          %307 = vsyncadd %s297, %s306
          %s308 = smul.addr %s304, 128
          %s309 = scalar_lea.hbm %s4, %s308
          %s310 = sshll.u32 %s300, 4
          %s311 = int_to_ptr.vmem [resolvable:$true] %s310
          %316 = dma.vmem_to_hbm [thread:$0]  %s311, 256, %s309, %s297, 128, 128, 8
        $region36: #{conv_embedding_forward.2} parent=31 // pred_fallthru
          _
      $region32: #{conv_embedding_forward.2} parent=5 // pred_fallthru
        _
      %p317 = scmp.le.s32.totalorder 2, %s14
      // Predicated region
      $region37: #{conv_embedding_forward.2} parent=5 // pred_check
        %p318 = pneg %p317
      $region38: #{conv_embedding_forward.2} parent=5 // pred_check_branch
        %320 = sbr.rel (%p318) target = $region40
      $region39: #{conv_embedding_forward.2} parent=5 // pred_region
        %s321 = ssub.s32 %s14, 2
        // Predicated region
        $region41: #{conv_embedding_forward.2} parent=39 // pred_check
          %p322 = pneg %p111
        $region42: #{conv_embedding_forward.2} parent=39 // pred_check_branch
          %324 = sbr.rel (%p322) target = $region44
        $region43: #{conv_embedding_forward.2} parent=39 // pred_region
          %s325 = sand.u32 %s96, 1
          %s326 = scalar_lea.sflag [#allocation8], %s325
          %s327 = sand.u32 %s96, 1
          %s328 = smul.addr %s327, 16
          %s329 = scalar_lea.vmem [#allocation7], %s328
          %330 = dma.done %s326, 256
        $region44: #{conv_embedding_forward.2} parent=39 // pred_fallthru
          _
      $region40: #{conv_embedding_forward.2} parent=5 // pred_fallthru
        _
    $region6: #{conv_embedding_forward.2} parent=1 // loop_footer
      %s18 = sadd.s32 1, %s14
    $region7: #{conv_embedding_forward.2} parent=1 // loop_footer_branch
      %13 = sbr.rel target = $region3
    $region8: #{conv_embedding_forward.2} parent=1 // loop_exit
      _
    %331 = vsyncpa [#allocation8], 1
    %s332 = scalar_lea.sflag [#allocation8], 1
    %333 = vsyncpa %s332, 1

</llo_original>
